<compile_context>
chip_gen: v5e
topology: v5e:2x2
jax: 0.10.0
libtpu: 0.0.40
codegen_flags: <defaults>
</compile_context>

<pallas_src>
import functools

import jax
import jax.numpy as jnp
from jax.experimental import pallas as pl
from jax.experimental.pallas import tpu as pltpu

HIDDEN_SIZE = 200  # matches hidden_size in ActiveDefender.__init__


def _round_up(n, m):
    return ((n + m - 1) // m) * m


def _vmem_capacity_bytes():
    try:
        return int(pltpu.get_tpu_info().vmem_capacity_bytes)
    except Exception:
        return 64 << 20  # conservative: v7x per-TensorCore VMEM


def _choose_batch_tile(B, E, HP, op_bytes, out_bytes, budget):
    """Largest batch tile fitting the VMEM budget, split so the grid has >=4
    steps when B allows (pipelining + v7x two-TensorCore sharding)."""
    # Single-buffered resident weights + f32 biases.
    weight_vmem = 2 * E * HP * op_bytes + (HP + E) * 4
    # Per-batch-row VMEM: double-buffered x (f32 in HBM) and out tiles, f32
    # hidden intermediate, plus cast copies of x / h feeding the MXU.
    per_row = (2 * E * 4 + 2 * E * out_bytes + HP * 4
               + E * op_bytes + HP * op_bytes)
    tb_budget = max((budget - weight_vmem) // per_row, 8)
    tb_split = _round_up(pl.cdiv(B, 4), 8)          # aim for >=4 grid steps
    tb = int(min(tb_budget, tb_split, 1024))
    if tb >= B:
        return B, weight_vmem, per_row               # single full-array tile (B<=8)
    return max((tb // 8) * 8, 8), weight_vmem, per_row


def ppm_mlp_kernel(x_ref, w1_ref, b1_ref, w2_ref, b2_ref, o_ref):
    # Operand cast on the VPU (free slot next to the MXU); no-op in the f32 path.
    x = x_ref[...].astype(w1_ref.dtype)
    # Linear(E -> H) + bias + ReLU(True); bias/ReLU kept in f32 (v5e-safe).
    h = jnp.dot(x, w1_ref[...], preferred_element_type=jnp.float32)
    h = jnp.maximum(h + b1_ref[...], 0.0)
    # Linear(H -> E) + bias.
    y = jnp.dot(h.astype(w2_ref.dtype), w2_ref[...],
                preferred_element_type=jnp.float32)
    o_ref[...] = (y + b2_ref[...]).astype(o_ref.dtype)


@functools.partial(jax.jit, static_argnames=("use_bf16", "out_dtype", "block_batch"))
def active_defender_forward(x, w1, b1, w2, b2, *, use_bf16=False, out_dtype=None,
                            block_batch=None):
    """Pallas implementation of ActiveDefender.forward (the ppm MLP).

    x : (B, E) float32;  w1: (E, H), b1: (H,), w2: (H, E), b2: (E,)
    use_bf16=True  -> bf16 MXU operands (f32 accumulation); recommended on
                      v5e/v6e/v7x when exact-f32 parity is not required.
    out_dtype      -> output dtype (default: x.dtype); bf16 halves store traffic.
    """
    B, E = x.shape
    H = w1.shape[1]
    dot_dtype = jnp.bfloat16 if use_bf16 else jnp.float32
    out_dt = jnp.dtype(out_dtype) if out_dtype is not None else jnp.dtype(x.dtype)
    op_b = jnp.dtype(dot_dtype).itemsize
    out_b = out_dt.itemsize

    HP = _round_up(H, 128)  # 200 -> 256: lane-dense hidden, full MXU tiles

    # Only the (tiny) weights are padded / cast on the host; x stays untouched.
    w1p = jnp.pad(w1.astype(dot_dtype), ((0, 0), (0, HP - H)))
    b1p = jnp.pad(b1.astype(jnp.float32), (0, HP - H)).reshape(1, HP)
    w2p = jnp.pad(w2.astype(dot_dtype), ((0, HP - H), (0, 0)))
    b2p = b2.astype(jnp.float32).reshape(1, E)

    # Per-generation VMEM budget (~40 MiB on v7x, ~80 MiB on v5e/v6e).
    capacity = _vmem_capacity_bytes()
    budget = max(capacity * 5 // 8, 16 << 20)
    TB, weight_vmem, per_row = _choose_batch_tile(B, E, HP, op_b, out_b, budget)
    if block_batch is not None and B > 8:
        cap = max((int(block_batch) // 8) * 8, 8)
        if cap < TB:
            TB = cap

    grid = (pl.cdiv(B, TB),)

    # VMEM limit = computed need + headroom (2x weights as margin in case the
    # compiler keeps them double-buffered anyway); never a lossy hard clamp.
    vmem_need = 2 * weight_vmem + TB * per_row
    vmem_limit = int(max(min(vmem_need + (4 << 20), capacity - (4 << 20)), 8 << 20))

    cost = pl.CostEstimate(
        flops=4 * B * E * HP,
        transcendentals=0,
        bytes_accessed=(B * E * (jnp.dtype(x.dtype).itemsize + out_b)
                        + 2 * E * HP * op_b + (HP + E) * 4),
    )

    resident = pl.Buffered(1)  # constant index maps -> DMA'd once, one buffer
    out = pl.pallas_call(
        ppm_mlp_kernel,
        out_shape=jax.ShapeDtypeStruct((B, E), out_dt),
        grid_spec=pltpu.PrefetchScalarGridSpec(
            num_scalar_prefetch=0,
            grid=grid,
            in_specs=[
                pl.BlockSpec((TB, E), lambda i: (i, 0)),   # x streams over batch
                pl.BlockSpec((E, HP), lambda i: (0, 0), pipeline_mode=resident),
                pl.BlockSpec((1, HP), lambda i: (0, 0), pipeline_mode=resident),
                pl.BlockSpec((HP, E), lambda i: (0, 0), pipeline_mode=resident),
                pl.BlockSpec((1, E), lambda i: (0, 0), pipeline_mode=resident),
            ],
            out_specs=pl.BlockSpec((TB, E), lambda i: (i, 0)),
        ),
        compiler_params=pltpu.CompilerParams(
            dimension_semantics=("parallel",),  # shards batch tiles on v7x megacore
            vmem_limit_bytes=vmem_limit,
        ),
        cost_estimate=cost,
    )(x, w1p, b1p, w2p, b2p)

    return out


def init_params(key, embedding_dim, hidden_size=HIDDEN_SIZE):
    """Deterministic init mimicking PyTorch nn.Linear (uniform +-1/sqrt(fan_in))."""
    k1, k2, k3, k4 = jax.random.split(key, 4)
    lim1 = 1.0 / jnp.sqrt(embedding_dim)
    lim2 = 1.0 / jnp.sqrt(hidden_size)
    w1 = jax.random.uniform(k1, (embedding_dim, hidden_size), jnp.float32, -lim1, lim1)
    b1 = jax.random.uniform(k2, (hidden_size,), jnp.float32, -lim1, lim1)
    w2 = jax.random.uniform(k3, (hidden_size, embedding_dim), jnp.float32, -lim2, lim2)
    b2 = jax.random.uniform(k4, (embedding_dim,), jnp.float32, -lim2, lim2)
    return w1, b1, w2, b2


if __name__ == "__main__":
    key = jax.random.PRNGKey(0)
    kx, kp, kr = jax.random.split(key, 3)

    batch = 8
    embedding_dim = 32

    x = jax.random.normal(kx, (batch, embedding_dim), jnp.float32)
    w1, b1, w2, b2 = init_params(kp, embedding_dim)

    # Reference: same math as nn.Sequential(Linear, ReLU, Linear) in f32.
    ref = jnp.maximum(x @ w1 + b1, 0.0) @ w2 + b2

    # f32 path: exact semantics of the PyTorch module.
    out = jax.block_until_ready(active_defender_forward(x, w1, b1, w2, b2))
    assert out.shape == (batch, embedding_dim) and out.dtype == jnp.float32
    assert jnp.allclose(out, ref, atol=1e-5, rtol=1e-5)

    # Ragged batch (exercises grid > 1 with a masked last batch tile).
    xr = jax.random.normal(kr, (10, embedding_dim), jnp.float32)
    refr = jnp.maximum(xr @ w1 + b1, 0.0) @ w2 + b2
    outr = jax.block_until_ready(active_defender_forward(xr, w1, b1, w2, b2))
    assert outr.shape == (10, embedding_dim)
    assert jnp.allclose(outr, refr, atol=1e-5, rtol=1e-5)

    # bf16 operand path (MXU throughput / halved weight VMEM), f32 accumulation.
    out_bf16 = jax.block_until_ready(
        active_defender_forward(x, w1, b1, w2, b2, use_bf16=True))
    assert out_bf16.shape == (batch, embedding_dim)
    assert jnp.allclose(out_bf16, ref, atol=3e-2, rtol=3e-2)

    # bf16 output dtype (halves store traffic / out-buffer VMEM).
    out_b16o = jax.block_until_ready(
        active_defender_forward(x, w1, b1, w2, b2, use_bf16=True,
                                out_dtype=jnp.bfloat16))
    assert out_b16o.dtype == jnp.bfloat16
    assert jnp.allclose(out_b16o.astype(jnp.float32), ref, atol=5e-2, rtol=5e-2)

    print("KERNEL_OK")
</pallas_src>

<mosaic_0001>
module attributes {stable_mosaic.version = 11 : i64} {
  func.func @ppm_mlp_kernel(%arg0: i32, %arg1: memref<8x32xf32, #tpu.memory_space<vmem>>, %arg2: memref<32x256xf32, #tpu.memory_space<vmem>>, %arg3: memref<1x256xf32, #tpu.memory_space<vmem>>, %arg4: memref<256x32xf32, #tpu.memory_space<vmem>>, %arg5: memref<1x32xf32, #tpu.memory_space<vmem>>, %arg6: memref<8x32xf32, #tpu.memory_space<vmem>>) attributes {dimension_semantics = [#tpu.dimension_semantics<parallel>], iteration_bounds = array<i64: 1>, scalar_prefetch = 0 : i64, scratch_operands = 0 : i64, tpu.core_type = #tpu.core_type<tc>, window_params = [{transform_indices = @transform_0, window_bounds = array<i64: 8, 32>}, {pipeline_mode = #tpu.pipeline_mode<synchronous>, transform_indices = @transform_1, window_bounds = array<i64: 32, 256>}, {pipeline_mode = #tpu.pipeline_mode<synchronous>, transform_indices = @transform_2, window_bounds = array<i64: 1, 256>}, {pipeline_mode = #tpu.pipeline_mode<synchronous>, transform_indices = @transform_3, window_bounds = array<i64: 256, 32>}, {pipeline_mode = #tpu.pipeline_mode<synchronous>, transform_indices = @transform_4, window_bounds = array<i64: 1, 32>}, {transform_indices = @transform_5, window_bounds = array<i64: 8, 32>}]} {
    %c0 = arith.constant 0 : index
    %c0_0 = arith.constant 0 : index
    %0 = vector.load %arg1[%c0, %c0_0] : memref<8x32xf32, #tpu.memory_space<vmem>>, vector<8x32xf32>
    %c0_1 = arith.constant 0 : index
    %c0_2 = arith.constant 0 : index
    %1 = vector.load %arg2[%c0_1, %c0_2] : memref<32x256xf32, #tpu.memory_space<vmem>>, vector<32x256xf32>
    %cst = arith.constant dense<0.000000e+00> : vector<8x256xf32>
    %2 = tpu.matmul %0, %1, %cst {dimension_numbers = #tpu.dot_dimension_numbers<[1], [0], [0], [1], [0, 0, 1, 1], [], []>} : vector<8x32xf32>, vector<32x256xf32>, vector<8x256xf32> -> vector<8x256xf32>
    %c0_3 = arith.constant 0 : index
    %c0_4 = arith.constant 0 : index
    %3 = vector.load %arg3[%c0_3, %c0_4] : memref<1x256xf32, #tpu.memory_space<vmem>>, vector<1x256xf32>
    %4 = vector.broadcast %3 : vector<1x256xf32> to vector<8x256xf32>
    %5 = arith.addf %2, %4 : vector<8x256xf32>
    %cst_5 = arith.constant 0.000000e+00 : f32
    %6 = vector.broadcast %cst_5 : f32 to vector<8x256xf32>
    %7 = arith.maximumf %5, %6 : vector<8x256xf32>
    %c0_6 = arith.constant 0 : index
    %c0_7 = arith.constant 0 : index
    %8 = vector.load %arg4[%c0_6, %c0_7] : memref<256x32xf32, #tpu.memory_space<vmem>>, vector<256x32xf32>
    %cst_8 = arith.constant dense<0.000000e+00> : vector<8x32xf32>
    %9 = tpu.matmul %7, %8, %cst_8 {dimension_numbers = #tpu.dot_dimension_numbers<[1], [0], [0], [1], [0, 0, 1, 1], [], []>} : vector<8x256xf32>, vector<256x32xf32>, vector<8x32xf32> -> vector<8x32xf32>
    %c0_9 = arith.constant 0 : index
    %c0_10 = arith.constant 0 : index
    %10 = vector.load %arg5[%c0_9, %c0_10] : memref<1x32xf32, #tpu.memory_space<vmem>>, vector<1x32xf32>
    %11 = vector.broadcast %10 : vector<1x32xf32> to vector<8x32xf32>
    %12 = arith.addf %9, %11 : vector<8x32xf32>
    %c0_11 = arith.constant 0 : index
    %c0_12 = arith.constant 0 : index
    %13 = vector.load %arg6[%c0_11, %c0_12] : memref<8x32xf32, #tpu.memory_space<vmem>>, vector<8x32xf32>
    tpu.vector_store %arg6[%c0_11, %c0_12], %12 {strides = array<i32>} : memref<8x32xf32, #tpu.memory_space<vmem>>, vector<8x32xf32>,
    return
  }
  func.func @transform_0(%arg0: i32) -> (i32, i32) {
    %c0_i32 = arith.constant 0 : i32
    %c0_i32_0 = arith.constant 0 : i32
    return %arg0, %c0_i32 : i32, i32
  }
  func.func @transform_1(%arg0: i32) -> (i32, i32) {
    %c0_i32 = arith.constant 0 : i32
    %c0_i32_0 = arith.constant 0 : i32
    %c0_i32_1 = arith.constant 0 : i32
    return %c0_i32, %c0_i32_0 : i32, i32
  }
  func.func @transform_2(%arg0: i32) -> (i32, i32) {
    %c0_i32 = arith.constant 0 : i32
    %c0_i32_0 = arith.constant 0 : i32
    %c0_i32_1 = arith.constant 0 : i32
    return %c0_i32, %c0_i32_0 : i32, i32
  }
  func.func @transform_3(%arg0: i32) -> (i32, i32) {
    %c0_i32 = arith.constant 0 : i32
    %c0_i32_0 = arith.constant 0 : i32
    %c0_i32_1 = arith.constant 0 : i32
    return %c0_i32, %c0_i32_0 : i32, i32
  }
  func.func @transform_4(%arg0: i32) -> (i32, i32) {
    %c0_i32 = arith.constant 0 : i32
    %c0_i32_0 = arith.constant 0 : i32
    %c0_i32_1 = arith.constant 0 : i32
    return %c0_i32, %c0_i32_0 : i32, i32
  }
  func.func @transform_5(%arg0: i32) -> (i32, i32) {
    %c0_i32 = arith.constant 0 : i32
    %c0_i32_0 = arith.constant 0 : i32
    return %arg0, %c0_i32 : i32, i32
  }
}

</mosaic_0001>

<llo_original>
// kernel: active_defender_forward.1
$region0: #{active_defender_forward.1}
  #allocation0 [shape = 'u32[]', space=smem, size = 0x4, offset = 0x4, fixed_abs, tag = 'smem constant byte address 0x4 - core index']
  #allocation1 [shape = 'u32[72,128]{1,0:T(1,128)}', space=vmem, size = 0x9000, scoped, tag = 'internal scratch']
  %s0 = inlined_call_operand.vmem [shape: f32[8,32], index: 0, kind: input, shape index: {}]
  %s1 = inlined_call_operand.vmem [shape: f32[32,256], index: 1, kind: input, shape index: {}]
  %s2 = inlined_call_operand.vmem [shape: f32[1,256], index: 2, kind: input, shape index: {}]
  %s3 = inlined_call_operand.vmem [shape: f32[256,32], index: 3, kind: input, shape index: {}]
  %s4 = inlined_call_operand.vmem [shape: f32[1,32], index: 4, kind: input, shape index: {}]
  %s5 = inlined_call_operand.hbm [shape: f32[8,32], index: 5, kind: output, shape index: {}]
  %s6 = sld [smem:[#allocation0]]
  $region30: #{active_defender_forward.1} parent=0
    _
  %s8 = ssub.s32 1, %s6
  %s9 = scalar_select 0, %s8, %s6
  $region1: #{active_defender_forward.1} parent=0
    #allocation2 [shape = 'u8[4096]{0}', space=vmem, size = 0x1000, scoped, tag = 'output window, operand 0, single buffered']
    #allocation3 [shape = 's32[1]{0}', space=sflag, size = 0x4, scoped, tag = 'scoped memory for active_defender_forward.1']
    %10 = vsyncpa [#allocation3], 0
    // Predicated region
    $region2: #{active_defender_forward.1} parent=1 // pred_check
      _
    $region3: #{active_defender_forward.1} parent=1 // pred_check_branch
      %12 = sbr.rel (0) target = $region5
    $region4: #{active_defender_forward.1} parent=1 // pred_region
      _
    $region5: #{active_defender_forward.1} parent=1 // pred_fallthru
      _
    // Predicated region
    $region6: #{active_defender_forward.1} parent=1 // pred_check
      _
    $region7: #{active_defender_forward.1} parent=1 // pred_check_branch
      %14 = sbr.rel (0) target = $region9
    $region8: #{active_defender_forward.1} parent=1 // pred_region
      _
    $region9: #{active_defender_forward.1} parent=1 // pred_fallthru
      _
    // Predicated region
    $region10: #{active_defender_forward.1} parent=1 // pred_check
      _
    $region11: #{active_defender_forward.1} parent=1 // pred_check_branch
      %16 = sbr.rel (0) target = $region13
    $region12: #{active_defender_forward.1} parent=1 // pred_region
      _
    $region13: #{active_defender_forward.1} parent=1 // pred_fallthru
      _
    // Predicated region
    $region14: #{active_defender_forward.1} parent=1 // pred_check
      _
    $region15: #{active_defender_forward.1} parent=1 // pred_check_branch
      %18 = sbr.rel (0) target = $region17
    $region16: #{active_defender_forward.1} parent=1 // pred_region
      _
    $region17: #{active_defender_forward.1} parent=1 // pred_fallthru
      _
    // Predicated region
    $region18: #{active_defender_forward.1} parent=1 // pred_check
      _
    $region19: #{active_defender_forward.1} parent=1 // pred_check_branch
      %20 = sbr.rel (0) target = $region21
    $region20: #{active_defender_forward.1} parent=1 // pred_region
      _
    $region21: #{active_defender_forward.1} parent=1 // pred_fallthru
      _
    %v21 = vld [vmem:[%s0] sm:$0xff]
    %v22 = vld [vmem:[%s1] sm:$0xff]
    %v23 = vld [vmem:[%s1 + $0x8] sm:$0xff]
    %v24 = vld [vmem:[%s1 + $0x10] sm:$0xff]
    %v25 = vld [vmem:[%s1 + $0x18] sm:$0xff]
    %v26 = vld [vmem:[%s1 + $0x20] sm:$0xff]
    %v27 = vld [vmem:[%s1 + $0x28] sm:$0xff]
    %v28 = vld [vmem:[%s1 + $0x30] sm:$0xff]
    %v29 = vld [vmem:[%s1 + $0x38] sm:$0xff]
    %v30 = vld [vmem:[%s2] sm:$0x3]
    %v32 = vperm.slane %v30, 0
    %v33 = vperm.slane %v30, 1
    %vm36 = vcmask 261120
    %v38 = vsel %vm36, %v21, 0
    %40 = vmatpush.msra.mxu0 0.0
    %41 = vmatpush.msra.mxu0 0.0
    %42 = vmatpush.msra.mxu0 0.0
    %43 = vmatpush.msra.mxu0 0.0
    %44 = vmatpush.msra.mxu0 0.0
    %45 = vmatpush.msra.mxu0 0.0
    %46 = vmatpush.msra.mxu0 0.0
    %47 = vmatpush.msra.mxu0 0.0
    %48 = vmatpush.msra.mxu0 0.0
    %49 = vmatpush.msra.mxu0 0.0
    %50 = vmatpush.msra.mxu0 0.0
    %51 = vmatpush.msra.mxu0 0.0
    %52 = vmatpush.msra.mxu0 %v28
    %53 = vmatpush.msra.mxu0 %v26
    %54 = vmatpush.msra.mxu0 %v24
    %55 = vmatpush.msra.mxu0 %v22
    %56 = vmatmul.f32.gmra.mxu0 %v38
    %v57 = vpop.f32.mrf.mxu0
    %v58 = vadd.f32 %v32, %v57
    %59 = vdwg.mxu0
    %60 = vmatpush.msra.mxu0 0.0
    %61 = vmatpush.msra.mxu0 0.0
    %62 = vmatpush.msra.mxu0 0.0
    %63 = vmatpush.msra.mxu0 0.0
    %64 = vmatpush.msra.mxu0 0.0
    %65 = vmatpush.msra.mxu0 0.0
    %66 = vmatpush.msra.mxu0 0.0
    %67 = vmatpush.msra.mxu0 0.0
    %68 = vmatpush.msra.mxu0 0.0
    %69 = vmatpush.msra.mxu0 0.0
    %70 = vmatpush.msra.mxu0 0.0
    %71 = vmatpush.msra.mxu0 0.0
    %72 = vmatpush.msra.mxu0 %v29
    %73 = vmatpush.msra.mxu0 %v27
    %74 = vmatpush.msra.mxu0 %v25
    %75 = vmatpush.msra.mxu0 %v23
    %76 = vmatmul.f32.gmra.mxu0 %v38
    %v77 = vpop.f32.mrf.mxu0
    %v78 = vadd.f32 %v33, %v77
    %79 = vdwg.mxu0
    %v80 = vmax.f32 %v58, 0.0
    %v81 = vmax.f32 %v78, 0.0
    %v82 = vld [vmem:[%s3] sm:$0xff]
    %v83 = vld [vmem:[%s3 + $0x8] sm:$0xff]
    %v84 = vld [vmem:[%s3 + $0x10] sm:$0xff]
    %v85 = vld [vmem:[%s3 + $0x18] sm:$0xff]
    %v86 = vld [vmem:[%s3 + $0x20] sm:$0xff]
    %v87 = vld [vmem:[%s3 + $0x28] sm:$0xff]
    %v88 = vld [vmem:[%s3 + $0x30] sm:$0xff]
    %v89 = vld [vmem:[%s3 + $0x38] sm:$0xff]
    %v90 = vld [vmem:[%s3 + $0x40] sm:$0xff]
    %v91 = vld [vmem:[%s3 + $0x48] sm:$0xff]
    %v92 = vld [vmem:[%s3 + $0x50] sm:$0xff]
    %v93 = vld [vmem:[%s3 + $0x58] sm:$0xff]
    %v94 = vld [vmem:[%s3 + $0x60] sm:$0xff]
    %v95 = vld [vmem:[%s3 + $0x68] sm:$0xff]
    %v96 = vld [vmem:[%s3 + $0x70] sm:$0xff]
    %v97 = vld [vmem:[%s3 + $0x78] sm:$0xff]
    %v98 = vld [vmem:[%s3 + $0x80] sm:$0xff]
    %v99 = vld [vmem:[%s3 + $0x88] sm:$0xff]
    %v100 = vld [vmem:[%s3 + $0x90] sm:$0xff]
    %v101 = vld [vmem:[%s3 + $0x98] sm:$0xff]
    %v102 = vld [vmem:[%s3 + $0xa0] sm:$0xff]
    %v103 = vld [vmem:[%s3 + $0xa8] sm:$0xff]
    %v104 = vld [vmem:[%s3 + $0xb0] sm:$0xff]
    %v105 = vld [vmem:[%s3 + $0xb8] sm:$0xff]
    %v106 = vld [vmem:[%s3 + $0xc0] sm:$0xff]
    %v107 = vld [vmem:[%s3 + $0xc8] sm:$0xff]
    %v108 = vld [vmem:[%s3 + $0xd0] sm:$0xff]
    %v109 = vld [vmem:[%s3 + $0xd8] sm:$0xff]
    %v110 = vld [vmem:[%s3 + $0xe0] sm:$0xff]
    %v111 = vld [vmem:[%s3 + $0xe8] sm:$0xff]
    %v112 = vld [vmem:[%s3 + $0xf0] sm:$0xff]
    %v113 = vld [vmem:[%s3 + $0xf8] sm:$0xff]
    %v114 = vld [vmem:[%s4] sm:$0x1]
    %v116 = vperm.slane %v114, 0
    %118 = vmatpush.msra.mxu0 %v97
    %119 = vmatpush.msra.mxu0 %v96
    %120 = vmatpush.msra.mxu0 %v95
    %121 = vmatpush.msra.mxu0 %v94
    %122 = vmatpush.msra.mxu0 %v93
    %123 = vmatpush.msra.mxu0 %v92
    %124 = vmatpush.msra.mxu0 %v91
    %125 = vmatpush.msra.mxu0 %v90
    %126 = vmatpush.msra.mxu0 %v89
    %127 = vmatpush.msra.mxu0 %v88
    %128 = vmatpush.msra.mxu0 %v87
    %129 = vmatpush.msra.mxu0 %v86
    %130 = vmatpush.msra.mxu0 %v85
    %131 = vmatpush.msra.mxu0 %v84
    %132 = vmatpush.msra.mxu0 %v83
    %133 = vmatpush.msra.mxu0 %v82
    %134 = vmatmul.f32.gmra.mxu0 %v80
    %v135 = vpop.f32.mrf.mxu0
    %v136 = vadd.f32 %v116, %v135
    %137 = vdwg.mxu0
    %138 = vmatpush.msra.mxu0 %v113
    %139 = vmatpush.msra.mxu0 %v112
    %140 = vmatpush.msra.mxu0 %v111
    %141 = vmatpush.msra.mxu0 %v110
    %142 = vmatpush.msra.mxu0 %v109
    %143 = vmatpush.msra.mxu0 %v108
    %144 = vmatpush.msra.mxu0 %v107
    %145 = vmatpush.msra.mxu0 %v106
    %146 = vmatpush.msra.mxu0 %v105
    %147 = vmatpush.msra.mxu0 %v104
    %148 = vmatpush.msra.mxu0 %v103
    %149 = vmatpush.msra.mxu0 %v102
    %150 = vmatpush.msra.mxu0 %v101
    %151 = vmatpush.msra.mxu0 %v100
    %152 = vmatpush.msra.mxu0 %v99
    %153 = vmatpush.msra.mxu0 %v98
    %154 = vmatmul.f32.gmra.mxu0 %v81
    %v155 = vpop.f32.mrf.mxu0
    %v156 = vadd.f32 %v136, %v155
    %157 = vdwg.mxu0
    %158 = vst.msk [vmem:[#allocation2] sm:$0xff] %vm36, %v156
    // Predicated region
    $region22: #{active_defender_forward.1} parent=1 // pred_check
      _
    $region23: #{active_defender_forward.1} parent=1 // pred_check_branch
      %160 = sbr.rel (0) target = $region25
    $region24: #{active_defender_forward.1} parent=1 // pred_region
      %162 = vsyncadd [#allocation3], 0
      %s164 = sshll.u32 [#allocation2], 4
      %s165 = int_to_ptr.vmem [resolvable:$true] %s164
      %s166 = sshll.u32 %s5, 4
      %s167 = int_to_ptr.hbm [resolvable:$true] %s166
      %169 = dma.vmem_to_hbm [thread:$0]  %s165, 128, %s167, [#allocation3]
    $region25: #{active_defender_forward.1} parent=1 // pred_fallthru
      _
    // Predicated region
    $region26: #{active_defender_forward.1} parent=1 // pred_check
      _
    $region27: #{active_defender_forward.1} parent=1 // pred_check_branch
      %171 = sbr.rel (0) target = $region29
    $region28: #{active_defender_forward.1} parent=1 // pred_region
      %173 = dma.done [#allocation3], 128
    $region29: #{active_defender_forward.1} parent=1 // pred_fallthru
      _
    %174 = vsyncpa [#allocation3], 1

</llo_original>
